<compile_context>
chip_gen: v7x
topology: tpu7x:2x2x1
jax: 0.10.0
libtpu: 0.0.40
codegen_flags: <defaults>
</compile_context>

<pallas_src>
import jax
import jax.numpy as jnp
from jax.experimental import pallas as pl
from jax.experimental.pallas import tpu as pltpu

IN_FEATURES = 512   # fixed by the module definition
HIDDEN = 32         # layers[0]


def _round_up(n, m):
    return ((n + m - 1) // m) * m


def net_kernel(x_ref, w1_ref, b1_ref, w2_ref, b2_ref, o_ref):
    # fc1: (TB, 512)bf16 @ (512, H)bf16 -> f32 accumulation on the MXU.
    h = jnp.dot(x_ref[...], w1_ref[...], preferred_element_type=jnp.float32)
    # th1 (EUP), bias add in f32.
    h = jnp.tanh(h + b1_ref[...])
    # dr1: Dropout -> identity (eval mode).
    # TODO(synk): training-mode dropout (Bernoulli mask / (1-p) scaling) would use
    # pltpu.prng_seed + pltpu.prng_random_bits; it cannot bit-match torch RNG anyway.
    # fc2 with out_features=1: VPU multiply + XLU cross-lane sum instead of an
    # N=1 MXU matmul (avoids wasting 255/256 result lanes + a second MXU pop).
    y = jnp.sum(h * w2_ref[...], axis=-1, keepdims=True) + b2_ref[0, 0]
    # th2
    o_ref[...] = jnp.tanh(y).astype(o_ref.dtype)


def net_forward(x, w1, b1, w2_row, b2, *, block_b=2048):
    """x: (B, 512) f32; w1: (512, H) f32; b1: (1, H); w2_row: (1, H); b2: (1, 1).

    Returns (B, 1) f32. x and w1 are streamed as bf16; accumulation is f32.
    """
    B = x.shape[0]
    H = w1.shape[1]

    # Batch tile: multiple of 8 (sublane), capped at block_b.  No padding of x:
    # the grid uses cdiv and the last tile may be ragged (handled by Pallas).
    tb = min(block_b, _round_up(B, 8))
    grid = pl.cdiv(B, tb)

    # bf16 cast of the dominant HBM streams; small params stay f32.
    x_bf = x.astype(jnp.bfloat16)
    w1_bf = w1.astype(jnp.bfloat16)

    cost = pl.CostEstimate(
        flops=2 * B * IN_FEATURES * H + 4 * B * H,
        transcendentals=B * (H + 1),
        bytes_accessed=(B * IN_FEATURES * 2          # x (bf16)
                        + IN_FEATURES * H * 2        # w1 (bf16)
                        + 2 * H * 4 + 4              # b1, w2_row, b2 (f32)
                        + B * 4),                    # output (f32)
    )

    out = pl.pallas_call(
        net_kernel,
        out_shape=jax.ShapeDtypeStruct((B, 1), jnp.float32),
        grid_spec=pl.GridSpec(
            grid=(grid,),
            in_specs=[
                pl.BlockSpec((tb, IN_FEATURES), lambda i: (i, 0)),   # x: tiled over batch
                pl.BlockSpec((IN_FEATURES, H), lambda i: (0, 0)),    # w1: VMEM-resident
                pl.BlockSpec((1, H), lambda i: (0, 0)),              # b1: VMEM-resident
                pl.BlockSpec((1, H), lambda i: (0, 0)),              # w2 row: VMEM-resident
                pl.BlockSpec(memory_space=pltpu.MemorySpace.SMEM),   # b2: SMEM scalar
            ],
            out_specs=pl.BlockSpec((tb, 1), lambda i: (i, 0)),
        ),
        compiler_params=pltpu.CompilerParams(
            dimension_semantics=("parallel",),       # batch axis shardable across TCs (v7x)
            vmem_limit_bytes=32 * 1024 * 1024,
        ),
        cost_estimate=cost,
    )(x_bf, w1_bf, b1, w2_row, b2)
    return out


def init_params(key, hidden=HIDDEN):
    """Deterministic init mimicking torch.nn.Linear default U[-1/sqrt(fan_in), +1/sqrt(fan_in)]."""
    k1, k2, k3, k4 = jax.random.split(key, 4)
    bound1 = 1.0 / jnp.sqrt(jnp.float32(IN_FEATURES))
    bound2 = 1.0 / jnp.sqrt(jnp.float32(hidden))
    # fc1 weight stored as (in, out) so the kernel does x @ W.
    w1 = jax.random.uniform(k1, (IN_FEATURES, hidden), jnp.float32, -bound1, bound1)
    b1 = jax.random.uniform(k2, (1, hidden), jnp.float32, -bound1, bound1)
    # fc2 weight stored as a (1, H) row for the VPU+XLU reduction in the kernel.
    w2_row = jax.random.uniform(k3, (1, hidden), jnp.float32, -bound2, bound2)
    b2 = jax.random.uniform(k4, (1, 1), jnp.float32, -bound2, bound2)
    return w1, b1, w2_row, b2


if __name__ == "__main__":
    key = jax.random.PRNGKey(0)
    kx, kp = jax.random.split(key)

    B = 300  # non-multiple of 8/128 -> exercises the ragged last tile path
    x = jax.random.normal(kx, (B, IN_FEATURES), jnp.float32)
    w1, b1, w2_row, b2 = init_params(kp)

    # Small block to exercise multiple grid steps + a ragged last tile.
    out = net_forward(x, w1, b1, w2_row, b2, block_b=128)
    out = jax.block_until_ready(out)

    # Default (large) block: single step with tb > B (partial block).
    out_big = net_forward(x, w1, b1, w2_row, b2)
    out_big = jax.block_until_ready(out_big)

    # reference check in plain JAX (same math, eval-mode dropout), f32.
    ref = jnp.tanh(jnp.tanh(x @ w1 + b1) @ w2_row.T + b2)
    assert out.shape == (B, 1)
    # bf16-streamed operands -> loosened tolerance vs the f32 reference.
    assert jnp.allclose(out, ref, atol=2e-2, rtol=2e-2), float(jnp.max(jnp.abs(out - ref)))
    assert jnp.allclose(out_big, ref, atol=2e-2, rtol=2e-2), float(jnp.max(jnp.abs(out_big - ref)))

    print("KERNEL_OK")
</pallas_src>

<mosaic_0001>
module attributes {stable_mosaic.version = 11 : i64} {
  func.func @net_kernel(%arg0: i32, %arg1: memref<128x512xbf16, #tpu.memory_space<vmem>>, %arg2: memref<512x32xbf16, #tpu.memory_space<vmem>>, %arg3: memref<1x32xf32, #tpu.memory_space<vmem>>, %arg4: memref<1x32xf32, #tpu.memory_space<vmem>>, %arg5: memref<1x1xf32, #tpu.memory_space<smem>>, %arg6: memref<128x1xf32, #tpu.memory_space<vmem>>) attributes {dimension_semantics = [#tpu.dimension_semantics<parallel>], iteration_bounds = array<i64: 3>, scalar_prefetch = 0 : i64, scratch_operands = 0 : i64, tpu.core_type = #tpu.core_type<tc>, window_params = [{transform_indices = @transform_0, window_bounds = array<i64: 128, 512>}, {pipeline_mode = #tpu.pipeline_mode<synchronous>, transform_indices = @transform_1, window_bounds = array<i64: 512, 32>}, {pipeline_mode = #tpu.pipeline_mode<synchronous>, transform_indices = @transform_2, window_bounds = array<i64: 1, 32>}, {pipeline_mode = #tpu.pipeline_mode<synchronous>, transform_indices = @transform_3, window_bounds = array<i64: 1, 32>}, {transform_indices = @transform_4, window_bounds = array<i64: 1, 1>}, {transform_indices = @transform_5, window_bounds = array<i64: 128, 1>}]} {
    %c0 = arith.constant 0 : index
    %c0_0 = arith.constant 0 : index
    %0 = vector.load %arg1[%c0, %c0_0] : memref<128x512xbf16, #tpu.memory_space<vmem>>, vector<128x512xbf16>
    %c0_1 = arith.constant 0 : index
    %c0_2 = arith.constant 0 : index
    %1 = vector.load %arg2[%c0_1, %c0_2] : memref<512x32xbf16, #tpu.memory_space<vmem>>, vector<512x32xbf16>
    %cst = arith.constant dense<0.000000e+00> : vector<128x32xf32>
    %2 = tpu.matmul %0, %1, %cst {dimension_numbers = #tpu.dot_dimension_numbers<[1], [0], [0], [1], [0, 0, 1, 1], [], []>} : vector<128x512xbf16>, vector<512x32xbf16>, vector<128x32xf32> -> vector<128x32xf32>
    %c0_3 = arith.constant 0 : index
    %c0_4 = arith.constant 0 : index
    %3 = vector.load %arg3[%c0_3, %c0_4] : memref<1x32xf32, #tpu.memory_space<vmem>>, vector<1x32xf32>
    %4 = vector.broadcast %3 : vector<1x32xf32> to vector<128x32xf32>
    %5 = arith.addf %2, %4 : vector<128x32xf32>
    %6 = math.tanh %5 : vector<128x32xf32>
    %c0_5 = arith.constant 0 : index
    %c0_6 = arith.constant 0 : index
    %7 = vector.load %arg4[%c0_5, %c0_6] : memref<1x32xf32, #tpu.memory_space<vmem>>, vector<1x32xf32>
    %8 = vector.broadcast %7 : vector<1x32xf32> to vector<128x32xf32>
    %9 = arith.mulf %6, %8 : vector<128x32xf32>
    %cst_7 = arith.constant dense<0.000000e+00> : vector<128xf32>
    %10 = vector.multi_reduction <add>, %9, %cst_7 [1] : vector<128x32xf32> to vector<128xf32>
    %11 = vector.shape_cast %10 : vector<128xf32> to vector<128x1xf32>
    %c0_8 = arith.constant 0 : index
    %c0_9 = arith.constant 0 : index
    %12 = memref.load %arg5[%c0_8, %c0_9] : memref<1x1xf32, #tpu.memory_space<smem>>
    %13 = vector.broadcast %12 : f32 to vector<128x1xf32>
    %14 = arith.addf %11, %13 : vector<128x1xf32>
    %15 = math.tanh %14 : vector<128x1xf32>
    %c0_10 = arith.constant 0 : index
    %c0_11 = arith.constant 0 : index
    %16 = vector.load %arg6[%c0_10, %c0_11] : memref<128x1xf32, #tpu.memory_space<vmem>>, vector<128x1xf32>
    tpu.vector_store %arg6[%c0_10, %c0_11], %15 {strides = array<i32>} : memref<128x1xf32, #tpu.memory_space<vmem>>, vector<128x1xf32>,
    return
  }
  func.func @transform_0(%arg0: i32) -> (i32, i32) {
    %c0_i32 = arith.constant 0 : i32
    %c0_i32_0 = arith.constant 0 : i32
    return %arg0, %c0_i32 : i32, i32
  }
  func.func @transform_1(%arg0: i32) -> (i32, i32) {
    %c0_i32 = arith.constant 0 : i32
    %c0_i32_0 = arith.constant 0 : i32
    %c0_i32_1 = arith.constant 0 : i32
    return %c0_i32, %c0_i32_0 : i32, i32
  }
  func.func @transform_2(%arg0: i32) -> (i32, i32) {
    %c0_i32 = arith.constant 0 : i32
    %c0_i32_0 = arith.constant 0 : i32
    %c0_i32_1 = arith.constant 0 : i32
    return %c0_i32, %c0_i32_0 : i32, i32
  }
  func.func @transform_3(%arg0: i32) -> (i32, i32) {
    %c0_i32 = arith.constant 0 : i32
    %c0_i32_0 = arith.constant 0 : i32
    %c0_i32_1 = arith.constant 0 : i32
    return %c0_i32, %c0_i32_0 : i32, i32
  }
  func.func @transform_4(%arg0: i32) -> (i32, i32) {
    %c0_i32 = arith.constant 0 : i32
    %c0_i32_0 = arith.constant 0 : i32
    %c0_i32_1 = arith.constant 0 : i32
    return %c0_i32, %c0_i32_0 : i32, i32
  }
  func.func @transform_5(%arg0: i32) -> (i32, i32) {
    %c0_i32 = arith.constant 0 : i32
    %c0_i32_0 = arith.constant 0 : i32
    return %arg0, %c0_i32 : i32, i32
  }
}

</mosaic_0001>

<llo_original>
// kernel: tpu_custom_call.1
$region0: #{tpu_custom_call.1}
  #allocation0 [shape = 'u32[]', space=smem, size = 0x4, offset = 0x4, fixed_abs, tag = 'smem constant byte address 0x4 - core index']
  #allocation1 [shape = 'u32[144,128]{1,0:T(1,128)}', space=vmem, size = 0x12000, scoped, tag = 'internal scratch']
  #allocation2 [shape = 'f32[1,1]{1,0:T(1,128)S(6)}', space=smem, size = 0x200, scoped, tag = 'scoped memory for tpu_custom_call.1']
  %s0 = inlined_call_operand.hbm [shape: bf16[300,512], index: 0, kind: input, shape index: {}]
  %s1 = inlined_call_operand.vmem [shape: bf16[512,32], index: 1, kind: input, shape index: {}]
  %s2 = inlined_call_operand.vmem [shape: f32[1,32], index: 2, kind: input, shape index: {}]
  %s3 = inlined_call_operand.vmem [shape: f32[1,32], index: 3, kind: input, shape index: {}]
  %s4 = inlined_call_operand.<no memory space> [shape: f32[1,1], index: 4, kind: input, shape index: {}]
  %s5 = inlined_call_operand.vmem [shape: f32[300,1], index: 5, kind: output, shape index: {}]
  %s6 = sld [smem:[#allocation0]]
  $region105: #{tpu_custom_call.1} parent=0
    _
  %s8 = ssub.s32 1, %s6
  %s9 = scalar_select 0, %s8, %s6
  %10 = sst [smem:[#allocation2]] %s4
  $region1: #{tpu_custom_call.1} parent=0
    #allocation3 [shape = 'u8[262144]{0}', space=vmem, size = 0x40000, scoped, tag = 'input window, operand 0']
    #allocation4 [shape = 's32[2]{0}', space=sflag, size = 0x8, scoped, tag = 'scoped memory for tpu_custom_call.1']
    #allocation5 [shape = 'u8[131072]{0}', space=vmem, size = 0x20000, scoped, tag = 'output window, operand 0']
    %11 = vsyncpa [#allocation4], 0
    %s12 = scalar_lea.sflag [#allocation4], 1
    %13 = vsyncpa %s12, 0
    loop: start=0, step=1, limit=5
    $region2: #{tpu_custom_call.1} parent=1 // loop_pre_header
      _
    $region3: #{tpu_custom_call.1} parent=1 // loop_header
      %s15 = sphi 0, %s19
      %p16 = scmp.ge.s32.totalorder %s15, 5
      %s25 = sphi 0, %s27
      %s28 = sphi 0, %s25
      %s29 = sphi 0, %s28
      %s45 = sphi 0, %s29
      %s49 = sphi 0, %s49
      %s51 = sphi 0, %s49
      %s52 = sphi 0, %s51
      %s66 = sphi 0, %s52
      %s70 = sphi 0, %s70
      %s72 = sphi 0, %s70
      %s73 = sphi 0, %s72
      %s87 = sphi 0, %s73
      %s91 = sphi 0, %s91
      %s93 = sphi 0, %s91
      %s94 = sphi 0, %s93
      %s108 = sphi 0, %s94
      %s112 = sphi 0, %s112
      %s114 = sphi 0, %s112
      %s115 = sphi 0, %s114
      %s129 = sphi 0, %s115
      %s135 = sphi 0, %s137
      %s138 = sphi 0, %s135
      %s139 = sphi 0, %s138
      %s155 = sphi 0, %s139
    $region4: #{tpu_custom_call.1} parent=1 // loop_header_branch
      %18 = sbr.rel (%p16) target = $region8
    $region5: #{tpu_custom_call.1} parent=1 // loop_body
      %s20 = ssub.s32 %s15, 1
      %s21 = ssub.s32 %s15, 2
      %s22 = sadd.s32 %s15, 1
      %s23 = ssub.s32 %s15, %s22
      %p24 = scmp.eq.s32.totalorder %s23, 0
      %s26 = sadd.s32 %s25, 1
      %s27 = scalar_select %p24, %s25, %s26
      %p30 = pneg %p24
      %p31 = scmp.eq.s32.totalorder %s15, 2
      %p32 = por %p30, %p31
      %p33 = scmp.ne.s32.totalorder %s25, %s28
      %p34 = scmp.eq.s32.totalorder %s15, 0
      %p35 = por %p33, %p34
      %p36 = scmp.ne.s32.totalorder %s25, %s28
      %p37 = scmp.eq.s32.totalorder %s20, 2
      %p38 = por %p36, %p37
      %p39 = scmp.ne.s32.totalorder %s28, %s29
      %p40 = scmp.eq.s32.totalorder %s20, 0
      %p41 = por %p39, %p40
      %p42 = scmp.ne.s32.totalorder %s28, %s29
      %p43 = scmp.eq.s32.totalorder %s21, 2
      %p44 = por %p42, %p43
      %p46 = scmp.ne.s32.totalorder %s29, %s45
      %p47 = scmp.eq.s32.totalorder %s21, 0
      %p48 = por %p46, %p47
      %s50 = sadd.s32 %s49, 1
      %p53 = scmp.eq.s32.totalorder %s15, 2
      %p54 = scmp.ne.s32.totalorder %s49, %s51
      %p55 = scmp.eq.s32.totalorder %s15, 0
      %p56 = por %p54, %p55
      %p57 = scmp.ne.s32.totalorder %s49, %s51
      %p58 = scmp.eq.s32.totalorder %s20, 2
      %p59 = por %p57, %p58
      %p60 = scmp.ne.s32.totalorder %s51, %s52
      %p61 = scmp.eq.s32.totalorder %s20, 0
      %p62 = por %p60, %p61
      %p63 = scmp.ne.s32.totalorder %s51, %s52
      %p64 = scmp.eq.s32.totalorder %s21, 2
      %p65 = por %p63, %p64
      %p67 = scmp.ne.s32.totalorder %s52, %s66
      %p68 = scmp.eq.s32.totalorder %s21, 0
      %p69 = por %p67, %p68
      %s71 = sadd.s32 %s70, 1
      %p74 = scmp.eq.s32.totalorder %s15, 2
      %p75 = scmp.ne.s32.totalorder %s70, %s72
      %p76 = scmp.eq.s32.totalorder %s15, 0
      %p77 = por %p75, %p76
      %p78 = scmp.ne.s32.totalorder %s70, %s72
      %p79 = scmp.eq.s32.totalorder %s20, 2
      %p80 = por %p78, %p79
      %p81 = scmp.ne.s32.totalorder %s72, %s73
      %p82 = scmp.eq.s32.totalorder %s20, 0
      %p83 = por %p81, %p82
      %p84 = scmp.ne.s32.totalorder %s72, %s73
      %p85 = scmp.eq.s32.totalorder %s21, 2
      %p86 = por %p84, %p85
      %p88 = scmp.ne.s32.totalorder %s73, %s87
      %p89 = scmp.eq.s32.totalorder %s21, 0
      %p90 = por %p88, %p89
      %s92 = sadd.s32 %s91, 1
      %p95 = scmp.eq.s32.totalorder %s15, 2
      %p96 = scmp.ne.s32.totalorder %s91, %s93
      %p97 = scmp.eq.s32.totalorder %s15, 0
      %p98 = por %p96, %p97
      %p99 = scmp.ne.s32.totalorder %s91, %s93
      %p100 = scmp.eq.s32.totalorder %s20, 2
      %p101 = por %p99, %p100
      %p102 = scmp.ne.s32.totalorder %s93, %s94
      %p103 = scmp.eq.s32.totalorder %s20, 0
      %p104 = por %p102, %p103
      %p105 = scmp.ne.s32.totalorder %s93, %s94
      %p106 = scmp.eq.s32.totalorder %s21, 2
      %p107 = por %p105, %p106
      %p109 = scmp.ne.s32.totalorder %s94, %s108
      %p110 = scmp.eq.s32.totalorder %s21, 0
      %p111 = por %p109, %p110
      %s113 = sadd.s32 %s112, 1
      %p116 = scmp.eq.s32.totalorder %s15, 2
      %p117 = scmp.ne.s32.totalorder %s112, %s114
      %p118 = scmp.eq.s32.totalorder %s15, 0
      %p119 = por %p117, %p118
      %p120 = scmp.ne.s32.totalorder %s112, %s114
      %p121 = scmp.eq.s32.totalorder %s20, 2
      %p122 = por %p120, %p121
      %p123 = scmp.ne.s32.totalorder %s114, %s115
      %p124 = scmp.eq.s32.totalorder %s20, 0
      %p125 = por %p123, %p124
      %p126 = scmp.ne.s32.totalorder %s114, %s115
      %p127 = scmp.eq.s32.totalorder %s21, 2
      %p128 = por %p126, %p127
      %p130 = scmp.ne.s32.totalorder %s115, %s129
      %p131 = scmp.eq.s32.totalorder %s21, 0
      %p132 = por %p130, %p131
      %s133 = ssub.s32 %s15, %s22
      %p134 = scmp.eq.s32.totalorder %s133, 0
      %s136 = sadd.s32 %s135, 1
      %s137 = scalar_select %p134, %s135, %s136
      %p140 = pneg %p134
      %p141 = scmp.eq.s32.totalorder %s15, 2
      %p142 = por %p140, %p141
      %p143 = scmp.ne.s32.totalorder %s135, %s138
      %p144 = scmp.eq.s32.totalorder %s15, 0
      %p145 = por %p143, %p144
      %p146 = scmp.ne.s32.totalorder %s135, %s138
      %p147 = scmp.eq.s32.totalorder %s20, 2
      %p148 = por %p146, %p147
      %p149 = scmp.ne.s32.totalorder %s138, %s139
      %p150 = scmp.eq.s32.totalorder %s20, 0
      %p151 = por %p149, %p150
      %p152 = scmp.ne.s32.totalorder %s138, %s139
      %p153 = scmp.eq.s32.totalorder %s21, 2
      %p154 = por %p152, %p153
      %p156 = scmp.ne.s32.totalorder %s139, %s155
      %p157 = scmp.eq.s32.totalorder %s21, 0
      %p158 = por %p156, %p157
      %p159 = scmp.le.s32.totalorder 1, %s15
      %p160 = scmp.lt.s32.totalorder %s15, 4
      %p161 = pnand %p159, %p160
      %p162 = pneg %p161
      // Predicated region
      $region9: #{tpu_custom_call.1} parent=5 // pred_check
        _
      $region10: #{tpu_custom_call.1} parent=5 // pred_check_branch
        %164 = sbr.rel (%p161) target = $region12
      $region11: #{tpu_custom_call.1} parent=5 // pred_region
        %s165 = ssub.s32 %s15, 1
        // Predicated region
        $region13: #{tpu_custom_call.1} parent=11 // pred_check
          %p166 = pneg %p62
        $region14: #{tpu_custom_call.1} parent=11 // pred_check_branch
          %168 = sbr.rel (%p166) target = $region16
        $region15: #{tpu_custom_call.1} parent=11 // pred_region
          _
        $region16: #{tpu_custom_call.1} parent=11 // pred_fallthru
          _
        // Predicated region
        $region17: #{tpu_custom_call.1} parent=11 // pred_check
          %p169 = pneg %p83
        $region18: #{tpu_custom_call.1} parent=11 // pred_check_branch
          %171 = sbr.rel (%p169) target = $region20
        $region19: #{tpu_custom_call.1} parent=11 // pred_region
          _
        $region20: #{tpu_custom_call.1} parent=11 // pred_fallthru
          _
        // Predicated region
        $region21: #{tpu_custom_call.1} parent=11 // pred_check
          %p172 = pneg %p104
        $region22: #{tpu_custom_call.1} parent=11 // pred_check_branch
          %174 = sbr.rel (%p172) target = $region24
        $region23: #{tpu_custom_call.1} parent=11 // pred_region
          _
        $region24: #{tpu_custom_call.1} parent=11 // pred_fallthru
          _
        // Predicated region
        $region25: #{tpu_custom_call.1} parent=11 // pred_check
          %p175 = pneg %p125
        $region26: #{tpu_custom_call.1} parent=11 // pred_check_branch
          %177 = sbr.rel (%p175) target = $region28
        $region27: #{tpu_custom_call.1} parent=11 // pred_region
          _
        $region28: #{tpu_custom_call.1} parent=11 // pred_fallthru
          _
      $region12: #{tpu_custom_call.1} parent=5 // pred_fallthru
        _
      %p178 = scmp.lt.s32.totalorder %s15, 3
      // Predicated region
      $region29: #{tpu_custom_call.1} parent=5 // pred_check
        %p179 = pneg %p178
      $region30: #{tpu_custom_call.1} parent=5 // pred_check_branch
        %181 = sbr.rel (%p179) target = $region32
      $region31: #{tpu_custom_call.1} parent=5 // pred_region
        // Predicated region
        $region33: #{tpu_custom_call.1} parent=31 // pred_check
          %p182 = pneg %p35
        $region34: #{tpu_custom_call.1} parent=31 // pred_check_branch
          %184 = sbr.rel (%p182) target = $region36
        $region35: #{tpu_custom_call.1} parent=31 // pred_region
          %s185 = sand.u32 %s25, 1
          %s186 = scalar_lea.sflag [#allocation4], %s185
          %s187 = sand.u32 %s25, 1
          %s188 = smul.addr %s187, 256
          %s189 = scalar_lea.vmem [#allocation3], %s188
          %s190 = smul.u32 16, %s15
          %s191 = ssub.s32 38, %s190
          %p192 = scmp.lt.s32.totalorder %s191, 16
          %s193 = scalar_select %p192, %s191, 16
          %s194 = smul.u32 64, %s193
          %s195 = smul.u32 %s194, 4
          %s197 = ssub.s32 4096, %s195
          %198 = vsyncadd %s186, %s197
          %p199 = scmp.ne.s32.totalorder 0, %s195
          %s200 = smul.addr %s190, 4
          %s201 = smul.addr %s200, 64
          %s202 = scalar_lea.hbm %s0, %s201
          %s203 = smul.u32 16, %s193
          %s204 = sshll.u32 %s189, 4
          %s205 = int_to_ptr.vmem [resolvable:$true] %s204
          %s206 = sshll.u32 %s203, 4
          %210 = dma.hbm_to_vmem [thread:$0]  (%p199), %s202, %s206, %s205, %s186, 256, 256, 16
        $region36: #{tpu_custom_call.1} parent=31 // pred_fallthru
          _
      $region32: #{tpu_custom_call.1} parent=5 // pred_fallthru
        _
      %p211 = scmp.le.s32.totalorder 1, %s15
      %p212 = scmp.lt.s32.totalorder %s15, 4
      %p213 = pnand %p211, %p212
      %p214 = pneg %p213
      // Predicated region
      $region37: #{tpu_custom_call.1} parent=5 // pred_check
        _
      $region38: #{tpu_custom_call.1} parent=5 // pred_check_branch
        %216 = sbr.rel (%p213) target = $region40
      $region39: #{tpu_custom_call.1} parent=5 // pred_region
        %s217 = ssub.s32 %s15, 1
        %s218 = sand.u32 %s28, 1
        %s219 = scalar_lea.sflag [#allocation4], %s218
        %s220 = sand.u32 %s28, 1
        %s221 = smul.addr %s220, 256
        %s222 = scalar_lea.vmem [#allocation3], %s221
        // Predicated region
        $region41: #{tpu_custom_call.1} parent=39 // pred_check
          %p223 = pneg %p41
        $region42: #{tpu_custom_call.1} parent=39 // pred_check_branch
          %225 = sbr.rel (%p223) target = $region44
        $region43: #{tpu_custom_call.1} parent=39 // pred_region
          %226 = dma.done %s219, 4096
        $region44: #{tpu_custom_call.1} parent=39 // pred_fallthru
          _
        %s227 = sand.u32 %s28, 1
        %s228 = scalar_lea.sflag [#allocation4], %s227
        %s229 = sand.u32 %s28, 1
        %s230 = smul.addr %s229, 256
        %s231 = scalar_lea.vmem [#allocation3], %s230
        %p232 = pneg %p41
        %p233 = pneg %p38
        %p234 = pneg %p62
        %p235 = pneg %p59
        %p236 = pneg %p83
        %p237 = pneg %p80
        %p238 = pneg %p104
        %p239 = pneg %p101
        %p240 = pneg %p125
        %p241 = pneg %p122
        %p242 = pneg %p151
        %p243 = pneg %p148
        %s244 = sand.u32 %s138, 1
        %s245 = sand.u32 %s138, 1
        %s246 = smul.addr %s245, 128
        %s247 = scalar_lea.vmem [#allocation5], %s246
        %s248 = smul.u32 16, %s20
        %s249 = ssub.s32 38, %s248
        %p250 = scmp.lt.s32.totalorder %s249, 16
        %s251 = scalar_select %p250, %s249, 16
        %s252 = smul.u32 64, %s251
        %s253 = smul.u32 %s252, 4
        %s254 = smul.u32 16, %s20
        %s255 = ssub.s32 38, %s254
        %p256 = scmp.lt.s32.totalorder %s255, 16
        %s257 = scalar_select %p256, %s255, 16
        %s258 = smul.u32 128, %s257
        %v260 = vld [vmem:[%s222] sm:$0xff]
        %v261 = vld [vmem:[%s222 + $0x8] sm:$0xff]
        %v262 = vld [vmem:[%s222 + $0x10] sm:$0xff]
        %v263 = vld [vmem:[%s222 + $0x18] sm:$0xff]
        %v264 = vld [vmem:[%s222 + $0x20] sm:$0xff]
        %v265 = vld [vmem:[%s222 + $0x28] sm:$0xff]
        %v266 = vld [vmem:[%s222 + $0x30] sm:$0xff]
        %v267 = vld [vmem:[%s222 + $0x38] sm:$0xff]
        %v268 = vld [vmem:[%s222 + $0x40] sm:$0xff]
        %v269 = vld [vmem:[%s222 + $0x48] sm:$0xff]
        %v270 = vld [vmem:[%s222 + $0x50] sm:$0xff]
        %v271 = vld [vmem:[%s222 + $0x58] sm:$0xff]
        %v272 = vld [vmem:[%s222 + $0x60] sm:$0xff]
        %v273 = vld [vmem:[%s222 + $0x68] sm:$0xff]
        %v274 = vld [vmem:[%s222 + $0x70] sm:$0xff]
        %v275 = vld [vmem:[%s222 + $0x78] sm:$0xff]
        %v276 = vld [vmem:[%s222 + $0x80] sm:$0xff]
        %v277 = vld [vmem:[%s222 + $0x88] sm:$0xff]
        %v278 = vld [vmem:[%s222 + $0x90] sm:$0xff]
        %v279 = vld [vmem:[%s222 + $0x98] sm:$0xff]
        %v280 = vld [vmem:[%s222 + $0xa0] sm:$0xff]
        %v281 = vld [vmem:[%s222 + $0xa8] sm:$0xff]
        %v282 = vld [vmem:[%s222 + $0xb0] sm:$0xff]
        %v283 = vld [vmem:[%s222 + $0xb8] sm:$0xff]
        %v284 = vld [vmem:[%s222 + $0xc0] sm:$0xff]
        %v285 = vld [vmem:[%s222 + $0xc8] sm:$0xff]
        %v286 = vld [vmem:[%s222 + $0xd0] sm:$0xff]
        %v287 = vld [vmem:[%s222 + $0xd8] sm:$0xff]
        %v288 = vld [vmem:[%s222 + $0xe0] sm:$0xff]
        %v289 = vld [vmem:[%s222 + $0xe8] sm:$0xff]
        %v290 = vld [vmem:[%s222 + $0xf0] sm:$0xff]
        %v291 = vld [vmem:[%s222 + $0xf8] sm:$0xff]
        %v292 = vld [vmem:[%s1] sm:$0xf]
        %v293 = vld [vmem:[%s1 + $0x4] sm:$0xf]
        %v294 = vld [vmem:[%s1 + $0x8] sm:$0xf]
        %v295 = vld [vmem:[%s1 + $0xc] sm:$0xf]
        %v296 = vld [vmem:[%s1 + $0x10] sm:$0xf]
        %v297 = vld [vmem:[%s1 + $0x14] sm:$0xf]
        %v298 = vld [vmem:[%s1 + $0x18] sm:$0xf]
        %v299 = vld [vmem:[%s1 + $0x1c] sm:$0xf]
        %v300 = vld [vmem:[%s1 + $0x20] sm:$0xf]
        %v301 = vld [vmem:[%s1 + $0x24] sm:$0xf]
        %v302 = vld [vmem:[%s1 + $0x28] sm:$0xf]
        %v303 = vld [vmem:[%s1 + $0x2c] sm:$0xf]
        %v304 = vld [vmem:[%s1 + $0x30] sm:$0xf]
        %v305 = vld [vmem:[%s1 + $0x34] sm:$0xf]
        %v306 = vld [vmem:[%s1 + $0x38] sm:$0xf]
        %v307 = vld [vmem:[%s1 + $0x3c] sm:$0xf]
        %v308 = vld [vmem:[%s1 + $0x40] sm:$0xf]
        %v309 = vld [vmem:[%s1 + $0x44] sm:$0xf]
        %v310 = vld [vmem:[%s1 + $0x48] sm:$0xf]
        %v311 = vld [vmem:[%s1 + $0x4c] sm:$0xf]
        %v312 = vld [vmem:[%s1 + $0x50] sm:$0xf]
        %v313 = vld [vmem:[%s1 + $0x54] sm:$0xf]
        %v314 = vld [vmem:[%s1 + $0x58] sm:$0xf]
        %v315 = vld [vmem:[%s1 + $0x5c] sm:$0xf]
        %v316 = vld [vmem:[%s1 + $0x60] sm:$0xf]
        %v317 = vld [vmem:[%s1 + $0x64] sm:$0xf]
        %v318 = vld [vmem:[%s1 + $0x68] sm:$0xf]
        %v319 = vld [vmem:[%s1 + $0x6c] sm:$0xf]
        %v320 = vld [vmem:[%s1 + $0x70] sm:$0xf]
        %v321 = vld [vmem:[%s1 + $0x74] sm:$0xf]
        %v322 = vld [vmem:[%s1 + $0x78] sm:$0xf]
        %v323 = vld [vmem:[%s1 + $0x7c] sm:$0xf]
        %v324 = vld [vmem:[%s1 + $0x80] sm:$0xf]
        %v325 = vld [vmem:[%s1 + $0x84] sm:$0xf]
        %v326 = vld [vmem:[%s1 + $0x88] sm:$0xf]
        %v327 = vld [vmem:[%s1 + $0x8c] sm:$0xf]
        %v328 = vld [vmem:[%s1 + $0x90] sm:$0xf]
        %v329 = vld [vmem:[%s1 + $0x94] sm:$0xf]
        %v330 = vld [vmem:[%s1 + $0x98] sm:$0xf]
        %v331 = vld [vmem:[%s1 + $0x9c] sm:$0xf]
        %v332 = vld [vmem:[%s1 + $0xa0] sm:$0xf]
        %v333 = vld [vmem:[%s1 + $0xa4] sm:$0xf]
        %v334 = vld [vmem:[%s1 + $0xa8] sm:$0xf]
        %v335 = vld [vmem:[%s1 + $0xac] sm:$0xf]
        %v336 = vld [vmem:[%s1 + $0xb0] sm:$0xf]
        %v337 = vld [vmem:[%s1 + $0xb4] sm:$0xf]
        %v338 = vld [vmem:[%s1 + $0xb8] sm:$0xf]
        %v339 = vld [vmem:[%s1 + $0xbc] sm:$0xf]
        %v340 = vld [vmem:[%s1 + $0xc0] sm:$0xf]
        %v341 = vld [vmem:[%s1 + $0xc4] sm:$0xf]
        %v342 = vld [vmem:[%s1 + $0xc8] sm:$0xf]
        %v343 = vld [vmem:[%s1 + $0xcc] sm:$0xf]
        %v344 = vld [vmem:[%s1 + $0xd0] sm:$0xf]
        %v345 = vld [vmem:[%s1 + $0xd4] sm:$0xf]
        %v346 = vld [vmem:[%s1 + $0xd8] sm:$0xf]
        %v347 = vld [vmem:[%s1 + $0xdc] sm:$0xf]
        %v348 = vld [vmem:[%s1 + $0xe0] sm:$0xf]
        %v349 = vld [vmem:[%s1 + $0xe4] sm:$0xf]
        %v350 = vld [vmem:[%s1 + $0xe8] sm:$0xf]
        %v351 = vld [vmem:[%s1 + $0xec] sm:$0xf]
        %v352 = vld [vmem:[%s1 + $0xf0] sm:$0xf]
        %v353 = vld [vmem:[%s1 + $0xf4] sm:$0xf]
        %v354 = vld [vmem:[%s1 + $0xf8] sm:$0xf]
        %v355 = vld [vmem:[%s1 + $0xfc] sm:$0xf]
        %v356 = vld [vmem:[%s2] sm:$0x1]
        %v358 = vlaneseq
        %v359 = vshrl.u32 %v358, 7
        %v360 = vsub.s32 0, %v359
        %v361 = vrot.slane %v356, %v360
        %v395 = vunpack.c.l.b16 %v260
        %v396 = vunpack.c.h.b16 %v260
        %v397 = vunpack.c.l.b16 %v261
        %v398 = vunpack.c.h.b16 %v261
        %v399 = vunpack.c.l.b16 %v262
        %v400 = vunpack.c.h.b16 %v262
        %v401 = vunpack.c.l.b16 %v263
        %v402 = vunpack.c.h.b16 %v263
        %v403 = vunpack.c.l.b16 %v264
        %v404 = vunpack.c.h.b16 %v264
        %v405 = vunpack.c.l.b16 %v265
        %v406 = vunpack.c.h.b16 %v265
        %v407 = vunpack.c.l.b16 %v266
        %v408 = vunpack.c.h.b16 %v266
        %v409 = vunpack.c.l.b16 %v267
        %v410 = vunpack.c.h.b16 %v267
        %v411 = vunpack.c.l.b16 %v268
        %v412 = vunpack.c.h.b16 %v268
        %v413 = vunpack.c.l.b16 %v269
        %v414 = vunpack.c.h.b16 %v269
        %v415 = vunpack.c.l.b16 %v270
        %v416 = vunpack.c.h.b16 %v270
        %v417 = vunpack.c.l.b16 %v271
        %v418 = vunpack.c.h.b16 %v271
        %v419 = vunpack.c.l.b16 %v272
        %v420 = vunpack.c.h.b16 %v272
        %v421 = vunpack.c.l.b16 %v273
        %v422 = vunpack.c.h.b16 %v273
        %v423 = vunpack.c.l.b16 %v274
        %v424 = vunpack.c.h.b16 %v274
        %v425 = vunpack.c.l.b16 %v275
        %v426 = vunpack.c.h.b16 %v275
        %v427 = vunpack.c.l.b16 %v276
        %v428 = vunpack.c.h.b16 %v276
        %v429 = vunpack.c.l.b16 %v277
        %v430 = vunpack.c.h.b16 %v277
        %v431 = vunpack.c.l.b16 %v278
        %v432 = vunpack.c.h.b16 %v278
        %v433 = vunpack.c.l.b16 %v279
        %v434 = vunpack.c.h.b16 %v279
        %v435 = vunpack.c.l.b16 %v280
        %v436 = vunpack.c.h.b16 %v280
        %v437 = vunpack.c.l.b16 %v281
        %v438 = vunpack.c.h.b16 %v281
        %v439 = vunpack.c.l.b16 %v282
        %v440 = vunpack.c.h.b16 %v282
        %v441 = vunpack.c.l.b16 %v283
        %v442 = vunpack.c.h.b16 %v283
        %v443 = vunpack.c.l.b16 %v284
        %v444 = vunpack.c.h.b16 %v284
        %v445 = vunpack.c.l.b16 %v285
        %v446 = vunpack.c.h.b16 %v285
        %v447 = vunpack.c.l.b16 %v286
        %v448 = vunpack.c.h.b16 %v286
        %v449 = vunpack.c.l.b16 %v287
        %v450 = vunpack.c.h.b16 %v287
        %v451 = vunpack.c.l.b16 %v288
        %v452 = vunpack.c.h.b16 %v288
        %v453 = vunpack.c.l.b16 %v289
        %v454 = vunpack.c.h.b16 %v289
        %v455 = vunpack.c.l.b16 %v290
        %v456 = vunpack.c.h.b16 %v290
        %v457 = vunpack.c.l.b16 %v291
        %v458 = vunpack.c.h.b16 %v291
        %v459 = vpack.c.b16 %v399, %v395
        %v460 = vpack.c.b16 %v400, %v396
        %v461 = vpack.c.b16 %v401, %v397
        %v462 = vpack.c.b16 %v402, %v398
        %v463 = vpack.c.b16 %v407, %v403
        %v464 = vpack.c.b16 %v408, %v404
        %v465 = vpack.c.b16 %v409, %v405
        %v466 = vpack.c.b16 %v410, %v406
        %v467 = vpack.c.b16 %v415, %v411
        %v468 = vpack.c.b16 %v416, %v412
        %v469 = vpack.c.b16 %v417, %v413
        %v470 = vpack.c.b16 %v418, %v414
        %v471 = vpack.c.b16 %v423, %v419
        %v472 = vpack.c.b16 %v424, %v420
        %v473 = vpack.c.b16 %v425, %v421
        %v474 = vpack.c.b16 %v426, %v422
        %v475 = vpack.c.b16 %v431, %v427
        %v476 = vpack.c.b16 %v432, %v428
        %v477 = vpack.c.b16 %v433, %v429
        %v478 = vpack.c.b16 %v434, %v430
        %v479 = vpack.c.b16 %v439, %v435
        %v480 = vpack.c.b16 %v440, %v436
        %v481 = vpack.c.b16 %v441, %v437
        %v482 = vpack.c.b16 %v442, %v438
        %v483 = vpack.c.b16 %v447, %v443
        %v484 = vpack.c.b16 %v448, %v444
        %v485 = vpack.c.b16 %v449, %v445
        %v486 = vpack.c.b16 %v450, %v446
        %v487 = vpack.c.b16 %v455, %v451
        %v488 = vpack.c.b16 %v456, %v452
        %v489 = vpack.c.b16 %v457, %v453
        %v490 = vpack.c.b16 %v458, %v454
        %v587 = vunpack.c.l.b16 %v292
        %v588 = vunpack.c.l.b16 %v293
        %v589 = vunpack.c.l.b16 %v294
        %v590 = vunpack.c.l.b16 %v295
        %v591 = vunpack.c.l.b16 %v296
        %v592 = vunpack.c.l.b16 %v297
        %v593 = vunpack.c.l.b16 %v298
        %v594 = vunpack.c.l.b16 %v299
        %v595 = vunpack.c.l.b16 %v300
        %v596 = vunpack.c.l.b16 %v301
        %v597 = vunpack.c.l.b16 %v302
        %v598 = vunpack.c.l.b16 %v303
        %v599 = vunpack.c.l.b16 %v304
        %v600 = vunpack.c.l.b16 %v305
        %v601 = vunpack.c.l.b16 %v306
        %v602 = vunpack.c.l.b16 %v307
        %v603 = vunpack.c.l.b16 %v308
        %v604 = vunpack.c.l.b16 %v309
        %v605 = vunpack.c.l.b16 %v310
        %v606 = vunpack.c.l.b16 %v311
        %v607 = vunpack.c.l.b16 %v312
        %v608 = vunpack.c.l.b16 %v313
        %v609 = vunpack.c.l.b16 %v314
        %v610 = vunpack.c.l.b16 %v315
        %v611 = vunpack.c.l.b16 %v316
        %v612 = vunpack.c.l.b16 %v317
        %v613 = vunpack.c.l.b16 %v318
        %v614 = vunpack.c.l.b16 %v319
        %v615 = vunpack.c.l.b16 %v320
        %v616 = vunpack.c.l.b16 %v321
        %v617 = vunpack.c.l.b16 %v322
        %v618 = vunpack.c.l.b16 %v323
        %v619 = vunpack.c.l.b16 %v324
        %v620 = vunpack.c.l.b16 %v325
        %v621 = vunpack.c.l.b16 %v326
        %v622 = vunpack.c.l.b16 %v327
        %v623 = vunpack.c.l.b16 %v328
        %v624 = vunpack.c.l.b16 %v329
        %v625 = vunpack.c.l.b16 %v330
        %v626 = vunpack.c.l.b16 %v331
        %v627 = vunpack.c.l.b16 %v332
        %v628 = vunpack.c.l.b16 %v333
        %v629 = vunpack.c.l.b16 %v334
        %v630 = vunpack.c.l.b16 %v335
        %v631 = vunpack.c.l.b16 %v336
        %v632 = vunpack.c.l.b16 %v337
        %v633 = vunpack.c.l.b16 %v338
        %v634 = vunpack.c.l.b16 %v339
        %v635 = vunpack.c.l.b16 %v340
        %v636 = vunpack.c.l.b16 %v341
        %v637 = vunpack.c.l.b16 %v342
        %v638 = vunpack.c.l.b16 %v343
        %v639 = vunpack.c.l.b16 %v344
        %v640 = vunpack.c.l.b16 %v345
        %v641 = vunpack.c.l.b16 %v346
        %v642 = vunpack.c.l.b16 %v347
        %v643 = vunpack.c.l.b16 %v348
        %v644 = vunpack.c.l.b16 %v349
        %v645 = vunpack.c.l.b16 %v350
        %v646 = vunpack.c.l.b16 %v351
        %v647 = vunpack.c.l.b16 %v352
        %v648 = vunpack.c.l.b16 %v353
        %v649 = vunpack.c.l.b16 %v354
        %v650 = vunpack.c.l.b16 %v355
        %v651 = vpack.c.b16 %v588, %v587
        %v652 = vpack.c.b16 %v590, %v589
        %v653 = vpack.c.b16 %v592, %v591
        %v654 = vpack.c.b16 %v594, %v593
        %v655 = vpack.c.b16 %v596, %v595
        %v656 = vpack.c.b16 %v598, %v597
        %v657 = vpack.c.b16 %v600, %v599
        %v658 = vpack.c.b16 %v602, %v601
        %v659 = vpack.c.b16 %v604, %v603
        %v660 = vpack.c.b16 %v606, %v605
        %v661 = vpack.c.b16 %v608, %v607
        %v662 = vpack.c.b16 %v610, %v609
        %v663 = vpack.c.b16 %v612, %v611
        %v664 = vpack.c.b16 %v614, %v613
        %v665 = vpack.c.b16 %v616, %v615
        %v666 = vpack.c.b16 %v618, %v617
        %v667 = vpack.c.b16 %v620, %v619
        %v668 = vpack.c.b16 %v622, %v621
        %v669 = vpack.c.b16 %v624, %v623
        %v670 = vpack.c.b16 %v626, %v625
        %v671 = vpack.c.b16 %v628, %v627
        %v672 = vpack.c.b16 %v630, %v629
        %v673 = vpack.c.b16 %v632, %v631
        %v674 = vpack.c.b16 %v634, %v633
        %v675 = vpack.c.b16 %v636, %v635
        %v676 = vpack.c.b16 %v638, %v637
        %v677 = vpack.c.b16 %v640, %v639
        %v678 = vpack.c.b16 %v642, %v641
        %v679 = vpack.c.b16 %v644, %v643
        %v680 = vpack.c.b16 %v646, %v645
        %v681 = vpack.c.b16 %v648, %v647
        %v682 = vpack.c.b16 %v650, %v649
        %715 = vmatprep.subr.bf16.mxu0 0
        %716 = vmatpush1.bf16.msra.mxu0 %v651
        %717 = vmatprep.subr.bf16.mxu0 0
        %718 = vmatpush1.bf16.msra.mxu0 %v652
        %719 = vmatprep.subr.bf16.mxu0 0
        %720 = vmatpush1.bf16.msra.mxu0 %v653
        %721 = vmatprep.subr.bf16.mxu0 0
        %722 = vmatpush1.bf16.msra.mxu0 %v654
        %723 = vmatprep.subr.bf16.mxu0 0
        %724 = vmatpush1.bf16.msra.mxu0 %v655
        %725 = vmatprep.subr.bf16.mxu0 0
        %726 = vmatpush1.bf16.msra.mxu0 %v656
        %727 = vmatprep.subr.bf16.mxu0 0
        %728 = vmatpush1.bf16.msra.mxu0 %v657
        %729 = vmatprep.subr.bf16.mxu0 0
        %730 = vmatpush1.bf16.msra.mxu0 %v658
        %731 = vmatprep.subr.bf16.mxu0 0
        %732 = vmatpush1.bf16.msra.mxu0 %v659
        %733 = vmatprep.subr.bf16.mxu0 0
        %734 = vmatpush1.bf16.msra.mxu0 %v660
        %735 = vmatprep.subr.bf16.mxu0 0
        %736 = vmatpush1.bf16.msra.mxu0 %v661
        %737 = vmatprep.subr.bf16.mxu0 0
        %738 = vmatpush1.bf16.msra.mxu0 %v662
        %739 = vmatprep.subr.bf16.mxu0 0
        %740 = vmatpush1.bf16.msra.mxu0 %v663
        %741 = vmatprep.subr.bf16.mxu0 0
        %742 = vmatpush1.bf16.msra.mxu0 %v664
        %743 = vmatprep.subr.bf16.mxu0 0
        %744 = vmatpush1.bf16.msra.mxu0 %v665
        %745 = vmatprep.subr.bf16.mxu0 0
        %746 = vmatpush1.bf16.msra.mxu0 %v666
        %747 = vmatprep.mubr.bf16.mxu0 %v460
        %748 = vmatmul.mubr.bf16.gmra.mrb[0].mxu0 %v459
        %v749 = vpop.f32.mrb[0].mxu0
        %v750 = vadd.f32 %v361, %v749
        %v751 = vpop.f32.mrb[0].mxu0
        %v752 = vpop.f32.mrb[0].mxu0
        %v753 = vadd.f32 %v361, %v752
        %v754 = vpop.f32.mrb[0].mxu0
        %755 = vmatprep.mubr.bf16.mxu0 %v464
        %756 = vmatmul.mubr.bf16.gmra.mrb[0].mxu0 %v463
        %v757 = vpop.f32.mrb[0].mxu0
        %v758 = vadd.f32 %v361, %v757
        %v759 = vpop.f32.mrb[0].mxu0
        %v760 = vpop.f32.mrb[0].mxu0
        %v761 = vadd.f32 %v361, %v760
        %v762 = vpop.f32.mrb[0].mxu0
        %763 = vmatprep.mubr.bf16.mxu0 %v468
        %764 = vmatmul.mubr.bf16.gmra.mrb[0].mxu0 %v467
        %v765 = vpop.f32.mrb[0].mxu0
        %v766 = vadd.f32 %v361, %v765
        %v767 = vpop.f32.mrb[0].mxu0
        %v768 = vpop.f32.mrb[0].mxu0
        %v769 = vadd.f32 %v361, %v768
        %v770 = vpop.f32.mrb[0].mxu0
        %771 = vmatprep.mubr.bf16.mxu0 %v472
        %772 = vmatmul.mubr.bf16.gmra.mrb[0].mxu0 %v471
        %v773 = vpop.f32.mrb[0].mxu0
        %v774 = vadd.f32 %v361, %v773
        %v775 = vpop.f32.mrb[0].mxu0
        %v776 = vpop.f32.mrb[0].mxu0
        %v777 = vadd.f32 %v361, %v776
        %v778 = vpop.f32.mrb[0].mxu0
        %779 = vmatprep.mubr.bf16.mxu0 %v476
        %780 = vmatmul.mubr.bf16.gmra.mrb[0].mxu0 %v475
        %v781 = vpop.f32.mrb[0].mxu0
        %v782 = vadd.f32 %v361, %v781
        %v783 = vpop.f32.mrb[0].mxu0
        %v784 = vpop.f32.mrb[0].mxu0
        %v785 = vadd.f32 %v361, %v784
        %v786 = vpop.f32.mrb[0].mxu0
        %787 = vmatprep.mubr.bf16.mxu0 %v480
        %788 = vmatmul.mubr.bf16.gmra.mrb[0].mxu0 %v479
        %v789 = vpop.f32.mrb[0].mxu0
        %v790 = vadd.f32 %v361, %v789
        %v791 = vpop.f32.mrb[0].mxu0
        %v792 = vpop.f32.mrb[0].mxu0
        %v793 = vadd.f32 %v361, %v792
        %v794 = vpop.f32.mrb[0].mxu0
        %795 = vmatprep.mubr.bf16.mxu0 %v484
        %796 = vmatmul.mubr.bf16.gmra.mrb[0].mxu0 %v483
        %v797 = vpop.f32.mrb[0].mxu0
        %v798 = vadd.f32 %v361, %v797
        %v799 = vpop.f32.mrb[0].mxu0
        %v800 = vpop.f32.mrb[0].mxu0
        %v801 = vadd.f32 %v361, %v800
        %v802 = vpop.f32.mrb[0].mxu0
        %803 = vmatprep.mubr.bf16.mxu0 %v488
        %804 = vmatmul.mubr.bf16.gmra.mrb[0].mxu0 %v487
        %v805 = vpop.f32.mrb[0].mxu0
        %v806 = vadd.f32 %v361, %v805
        %v807 = vpop.f32.mrb[0].mxu0
        %v808 = vpop.f32.mrb[0].mxu0
        %v809 = vadd.f32 %v361, %v808
        %v810 = vpop.f32.mrb[0].mxu0
        %811 = vdwg.mxu0
        %812 = vmatprep.subr.bf16.mxu0 0
        %813 = vmatpush1.bf16.msra.mxu0 %v667
        %814 = vmatprep.subr.bf16.mxu0 0
        %815 = vmatpush1.bf16.msra.mxu0 %v668
        %816 = vmatprep.subr.bf16.mxu0 0
        %817 = vmatpush1.bf16.msra.mxu0 %v669
        %818 = vmatprep.subr.bf16.mxu0 0
        %819 = vmatpush1.bf16.msra.mxu0 %v670
        %820 = vmatprep.subr.bf16.mxu0 0
        %821 = vmatpush1.bf16.msra.mxu0 %v671
        %822 = vmatprep.subr.bf16.mxu0 0
        %823 = vmatpush1.bf16.msra.mxu0 %v672
        %824 = vmatprep.subr.bf16.mxu0 0
        %825 = vmatpush1.bf16.msra.mxu0 %v673
        %826 = vmatprep.subr.bf16.mxu0 0
        %827 = vmatpush1.bf16.msra.mxu0 %v674
        %828 = vmatprep.subr.bf16.mxu0 0
        %829 = vmatpush1.bf16.msra.mxu0 %v675
        %830 = vmatprep.subr.bf16.mxu0 0
        %831 = vmatpush1.bf16.msra.mxu0 %v676
        %832 = vmatprep.subr.bf16.mxu0 0
        %833 = vmatpush1.bf16.msra.mxu0 %v677
        %834 = vmatprep.subr.bf16.mxu0 0
        %835 = vmatpush1.bf16.msra.mxu0 %v678
        %836 = vmatprep.subr.bf16.mxu0 0
        %837 = vmatpush1.bf16.msra.mxu0 %v679
        %838 = vmatprep.subr.bf16.mxu0 0
        %839 = vmatpush1.bf16.msra.mxu0 %v680
        %840 = vmatprep.subr.bf16.mxu0 0
        %841 = vmatpush1.bf16.msra.mxu0 %v681
        %842 = vmatprep.subr.bf16.mxu0 0
        %843 = vmatpush1.bf16.msra.mxu0 %v682
        %844 = vmatprep.mubr.bf16.mxu0 %v462
        %845 = vmatmul.mubr.bf16.gmra.mrb[0].mxu0 %v461
        %v846 = vpop.f32.mrb[0].mxu0
        %v847 = vadd.f32 %v750, %v846
        %v848 = vpop.f32.mrb[0].mxu0
        %v849 = vpop.f32.mrb[0].mxu0
        %v850 = vadd.f32 %v753, %v849
        %v851 = vpop.f32.mrb[0].mxu0
        %852 = vmatprep.mubr.bf16.mxu0 %v466
        %853 = vmatmul.mubr.bf16.gmra.mrb[0].mxu0 %v465
        %v854 = vpop.f32.mrb[0].mxu0
        %v855 = vadd.f32 %v758, %v854
        %v856 = vpop.f32.mrb[0].mxu0
        %v857 = vpop.f32.mrb[0].mxu0
        %v858 = vadd.f32 %v761, %v857
        %v859 = vpop.f32.mrb[0].mxu0
        %860 = vmatprep.mubr.bf16.mxu0 %v470
        %861 = vmatmul.mubr.bf16.gmra.mrb[0].mxu0 %v469
        %v862 = vpop.f32.mrb[0].mxu0
        %v863 = vadd.f32 %v766, %v862
        %v864 = vpop.f32.mrb[0].mxu0
        %v865 = vpop.f32.mrb[0].mxu0
        %v866 = vadd.f32 %v769, %v865
        %v867 = vpop.f32.mrb[0].mxu0
        %868 = vmatprep.mubr.bf16.mxu0 %v474
        %869 = vmatmul.mubr.bf16.gmra.mrb[0].mxu0 %v473
        %v870 = vpop.f32.mrb[0].mxu0
        %v871 = vadd.f32 %v774, %v870
        %v872 = vpop.f32.mrb[0].mxu0
        %v873 = vpop.f32.mrb[0].mxu0
        %v874 = vadd.f32 %v777, %v873
        %v875 = vpop.f32.mrb[0].mxu0
        %876 = vmatprep.mubr.bf16.mxu0 %v478
        %877 = vmatmul.mubr.bf16.gmra.mrb[0].mxu0 %v477
        %v878 = vpop.f32.mrb[0].mxu0
        %v879 = vadd.f32 %v782, %v878
        %v880 = vpop.f32.mrb[0].mxu0
        %v881 = vpop.f32.mrb[0].mxu0
        %v882 = vadd.f32 %v785, %v881
        %v883 = vpop.f32.mrb[0].mxu0
        %884 = vmatprep.mubr.bf16.mxu0 %v482
        %885 = vmatmul.mubr.bf16.gmra.mrb[0].mxu0 %v481
        %v886 = vpop.f32.mrb[0].mxu0
        %v887 = vadd.f32 %v790, %v886
        %v888 = vpop.f32.mrb[0].mxu0
        %v889 = vpop.f32.mrb[0].mxu0
        %v890 = vadd.f32 %v793, %v889
        %v891 = vpop.f32.mrb[0].mxu0
        %892 = vmatprep.mubr.bf16.mxu0 %v486
        %893 = vmatmul.mubr.bf16.gmra.mrb[0].mxu0 %v485
        %v894 = vpop.f32.mrb[0].mxu0
        %v895 = vadd.f32 %v798, %v894
        %v896 = vpop.f32.mrb[0].mxu0
        %v897 = vpop.f32.mrb[0].mxu0
        %v898 = vadd.f32 %v801, %v897
        %v899 = vpop.f32.mrb[0].mxu0
        %900 = vmatprep.mubr.bf16.mxu0 %v490
        %901 = vmatmul.mubr.bf16.gmra.mrb[0].mxu0 %v489
        %v902 = vpop.f32.mrb[0].mxu0
        %v903 = vadd.f32 %v806, %v902
        %v904 = vpop.f32.mrb[0].mxu0
        %v905 = vpop.f32.mrb[0].mxu0
        %v906 = vadd.f32 %v809, %v905
        %v907 = vpop.f32.mrb[0].mxu0
        %908 = vdwg.mxu0
        %v909 = vtanh.pop %v847
        %v910 = vtanh.pop %v850
        %v911 = vtanh.pop %v855
        %v912 = vtanh.pop %v858
        %v913 = vtanh.pop %v863
        %v914 = vtanh.pop %v866
        %v915 = vtanh.pop %v871
        %v916 = vtanh.pop %v874
        %v917 = vtanh.pop %v879
        %v918 = vtanh.pop %v882
        %v919 = vtanh.pop %v887
        %v920 = vtanh.pop %v890
        %v921 = vtanh.pop %v895
        %v922 = vtanh.pop %v898
        %v923 = vtanh.pop %v903
        %v924 = vtanh.pop %v906
        %v925 = vld [vmem:[%s3] sm:$0x1]
        %v927 = vlaneseq
        %v928 = vshrl.u32 %v927, 7
        %v929 = vsub.s32 0, %v928
        %v930 = vrot.slane %v925, %v929
        %v932 = vmul.f32 %v909, %v930
        %v933 = vmul.f32 %v910, %v930
        %v934 = vmul.f32 %v911, %v930
        %v935 = vmul.f32 %v912, %v930
        %v936 = vmul.f32 %v913, %v930
        %v937 = vmul.f32 %v914, %v930
        %v938 = vmul.f32 %v915, %v930
        %v939 = vmul.f32 %v916, %v930
        %v940 = vmul.f32 %v917, %v930
        %v941 = vmul.f32 %v918, %v930
        %v942 = vmul.f32 %v919, %v930
        %v943 = vmul.f32 %v920, %v930
        %v944 = vmul.f32 %v921, %v930
        %v945 = vmul.f32 %v922, %v930
        %v946 = vmul.f32 %v923, %v930
        %v947 = vmul.f32 %v924, %v930
        %vm948 = vcmask 261120
        %v949 = vsel %vm948, %v932, 0.0
        %950 = vadd.xlane.f32.xlu0 %v949
        %v951 = vpop.xlane.xlu0 %950
        %v952 = vsel %vm948, %v933, 0.0
        %953 = vadd.xlane.f32.xlu0 %v952
        %v954 = vpop.xlane.xlu0 %953
        %v955 = vsel %vm948, %v934, 0.0
        %956 = vadd.xlane.f32.xlu0 %v955
        %v957 = vpop.xlane.xlu0 %956
        %v958 = vsel %vm948, %v935, 0.0
        %959 = vadd.xlane.f32.xlu0 %v958
        %v960 = vpop.xlane.xlu0 %959
        %v961 = vsel %vm948, %v936, 0.0
        %962 = vadd.xlane.f32.xlu0 %v961
        %v963 = vpop.xlane.xlu0 %962
        %v964 = vsel %vm948, %v937, 0.0
        %965 = vadd.xlane.f32.xlu0 %v964
        %v966 = vpop.xlane.xlu0 %965
        %v967 = vsel %vm948, %v938, 0.0
        %968 = vadd.xlane.f32.xlu0 %v967
        %v969 = vpop.xlane.xlu0 %968
        %v970 = vsel %vm948, %v939, 0.0
        %971 = vadd.xlane.f32.xlu0 %v970
        %v972 = vpop.xlane.xlu0 %971
        %v973 = vsel %vm948, %v940, 0.0
        %974 = vadd.xlane.f32.xlu0 %v973
        %v975 = vpop.xlane.xlu0 %974
        %v976 = vsel %vm948, %v941, 0.0
        %977 = vadd.xlane.f32.xlu0 %v976
        %v978 = vpop.xlane.xlu0 %977
        %v979 = vsel %vm948, %v942, 0.0
        %980 = vadd.xlane.f32.xlu0 %v979
        %v981 = vpop.xlane.xlu0 %980
        %v982 = vsel %vm948, %v943, 0.0
        %983 = vadd.xlane.f32.xlu0 %v982
        %v984 = vpop.xlane.xlu0 %983
        %v985 = vsel %vm948, %v944, 0.0
        %986 = vadd.xlane.f32.xlu0 %v985
        %v987 = vpop.xlane.xlu0 %986
        %v988 = vsel %vm948, %v945, 0.0
        %989 = vadd.xlane.f32.xlu0 %v988
        %v990 = vpop.xlane.xlu0 %989
        %v991 = vsel %vm948, %v946, 0.0
        %992 = vadd.xlane.f32.xlu0 %v991
        %v993 = vpop.xlane.xlu0 %992
        %v994 = vsel %vm948, %v947, 0.0
        %995 = vadd.xlane.f32.xlu0 %v994
        %v996 = vpop.xlane.xlu0 %995
        %s997 = sld [smem:[#allocation2]]
        %v998 = vstv %s997
        %v999 = vadd.f32 %v951, %v998
        %v1000 = vadd.f32 %v954, %v998
        %v1001 = vadd.f32 %v957, %v998
        %v1002 = vadd.f32 %v960, %v998
        %v1003 = vadd.f32 %v963, %v998
        %v1004 = vadd.f32 %v966, %v998
        %v1005 = vadd.f32 %v969, %v998
        %v1006 = vadd.f32 %v972, %v998
        %v1007 = vadd.f32 %v975, %v998
        %v1008 = vadd.f32 %v978, %v998
        %v1009 = vadd.f32 %v981, %v998
        %v1010 = vadd.f32 %v984, %v998
        %v1011 = vadd.f32 %v987, %v998
        %v1012 = vadd.f32 %v990, %v998
        %v1013 = vadd.f32 %v993, %v998
        %v1014 = vadd.f32 %v996, %v998
        %v1015 = vtanh.pop %v999
        %v1016 = vtanh.pop %v1000
        %v1017 = vtanh.pop %v1001
        %v1018 = vtanh.pop %v1002
        %v1019 = vtanh.pop %v1003
        %v1020 = vtanh.pop %v1004
        %v1021 = vtanh.pop %v1005
        %v1022 = vtanh.pop %v1006
        %v1023 = vtanh.pop %v1007
        %v1024 = vtanh.pop %v1008
        %v1025 = vtanh.pop %v1009
        %v1026 = vtanh.pop %v1010
        %v1027 = vtanh.pop %v1011
        %v1028 = vtanh.pop %v1012
        %v1029 = vtanh.pop %v1013
        %v1030 = vtanh.pop %v1014
        %vm1031 = vcmask 7168
        %1032 = vst.msk [vmem:[%s247] sm:$0xff] %vm1031, %v1015
        %1033 = vst.msk [vmem:[%s247 + $0x8] sm:$0xff] %vm1031, %v1016
        %1034 = vst.msk [vmem:[%s247 + $0x10] sm:$0xff] %vm1031, %v1017
        %1035 = vst.msk [vmem:[%s247 + $0x18] sm:$0xff] %vm1031, %v1018
        %1036 = vst.msk [vmem:[%s247 + $0x20] sm:$0xff] %vm1031, %v1019
        %1037 = vst.msk [vmem:[%s247 + $0x28] sm:$0xff] %vm1031, %v1020
        %1038 = vst.msk [vmem:[%s247 + $0x30] sm:$0xff] %vm1031, %v1021
        %1039 = vst.msk [vmem:[%s247 + $0x38] sm:$0xff] %vm1031, %v1022
        %1040 = vst.msk [vmem:[%s247 + $0x40] sm:$0xff] %vm1031, %v1023
        %1041 = vst.msk [vmem:[%s247 + $0x48] sm:$0xff] %vm1031, %v1024
        %1042 = vst.msk [vmem:[%s247 + $0x50] sm:$0xff] %vm1031, %v1025
        %1043 = vst.msk [vmem:[%s247 + $0x58] sm:$0xff] %vm1031, %v1026
        %1044 = vst.msk [vmem:[%s247 + $0x60] sm:$0xff] %vm1031, %v1027
        %1045 = vst.msk [vmem:[%s247 + $0x68] sm:$0xff] %vm1031, %v1028
        %1046 = vst.msk [vmem:[%s247 + $0x70] sm:$0xff] %vm1031, %v1029
        %1047 = vst.msk [vmem:[%s247 + $0x78] sm:$0xff] %vm1031, %v1030
        %s1048 = sand.u32 %s138, 1
        %s1049 = sand.u32 %s138, 1
        %s1050 = smul.addr %s1049, 128
        %s1051 = scalar_lea.vmem [#allocation5], %s1050
        // Predicated region
        $region45: #{tpu_custom_call.1} parent=39 // pred_check
          %p1052 = pneg %p148
        $region46: #{tpu_custom_call.1} parent=39 // pred_check_branch
          %1054 = sbr.rel (%p1052) target = $region48
        $region47: #{tpu_custom_call.1} parent=39 // pred_region
          %s1055 = smul.u32 16, %s20
          %s1056 = ssub.s32 38, %s1055
          %p1057 = scmp.lt.s32.totalorder %s1056, 16
          %s1058 = scalar_select %p1057, %s1056, 16
          %s1059 = smul.u32 128, %s1058
          %p1060 = scmp.ne.s32.totalorder 0, %s1059
          %s1061 = smul.addr %s1055, 8
          %s1062 = scalar_lea.vmem %s5, %s1061
          // Predicated region
          $region49: #{tpu_custom_call.1} parent=47 // pred_check
            %p1063 = pneg %p1060
          $region50: #{tpu_custom_call.1} parent=47 // pred_check_branch
            %1065 = sbr.rel (%p1063) target = $region52
          $region51: #{tpu_custom_call.1} parent=47 // pred_region
            // Predicated region
            $region53: #{tpu_custom_call.1} parent=51 // pred_check
              _
            $region54: #{tpu_custom_call.1} parent=51 // pred_check_branch
              %1067 = sbr.rel (0) target = $region56
            $region55: #{tpu_custom_call.1} parent=51 // pred_region
              // Predicated region
              $region75: #{tpu_custom_call.1} parent=55 // pred_check
                _
              $region76: #{tpu_custom_call.1} parent=55 // pred_check_branch
                %1146 = sbr.rel (0) target = $region78
              $region77: #{tpu_custom_call.1} parent=55 // pred_region
                %s1147 = sshrl.u32 %s1058, 4
                // While loop
                $region79: #{tpu_custom_call.1} parent=77 // loop_pre_header
                  _
                $region80: #{tpu_custom_call.1} parent=77 // loop_header
                  %s1149 = sphi 0, %s1151
                  %p1150 = scmp.ge.s32.totalorder %s1149, %s1147
                  %s1154 = sphi 0, %s1191
                  %s1155 = sphi %s1051, %s1194
                  %s1156 = sphi %s1062, %s1195
                $region81: #{tpu_custom_call.1} parent=77 // loop_header_branch
                  %1153 = sbr.rel (%p1150) target = $region85
                $region82: #{tpu_custom_call.1} parent=77 // loop_body
                  %v1157 = vld [vmem:[%s1155] sm:$0xff]
                  %1158 = vst [vmem:[%s1156] sm:$0xff] %v1157
                  %v1159 = vld [vmem:[%s1155 + $0x8] sm:$0xff]
                  %1160 = vst [vmem:[%s1156 + $0x8] sm:$0xff] %v1159
                  %v1161 = vld [vmem:[%s1155 + $0x10] sm:$0xff]
                  %1162 = vst [vmem:[%s1156 + $0x10] sm:$0xff] %v1161
                  %v1163 = vld [vmem:[%s1155 + $0x18] sm:$0xff]
                  %1164 = vst [vmem:[%s1156 + $0x18] sm:$0xff] %v1163
                  %v1165 = vld [vmem:[%s1155 + $0x20] sm:$0xff]
                  %1166 = vst [vmem:[%s1156 + $0x20] sm:$0xff] %v1165
                  %v1167 = vld [vmem:[%s1155 + $0x28] sm:$0xff]
                  %1168 = vst [vmem:[%s1156 + $0x28] sm:$0xff] %v1167
                  %v1169 = vld [vmem:[%s1155 + $0x30] sm:$0xff]
                  %1170 = vst [vmem:[%s1156 + $0x30] sm:$0xff] %v1169
                  %v1171 = vld [vmem:[%s1155 + $0x38] sm:$0xff]
                  %1172 = vst [vmem:[%s1156 + $0x38] sm:$0xff] %v1171
                  %v1173 = vld [vmem:[%s1155 + $0x40] sm:$0xff]
                  %1174 = vst [vmem:[%s1156 + $0x40] sm:$0xff] %v1173
                  %v1175 = vld [vmem:[%s1155 + $0x48] sm:$0xff]
                  %1176 = vst [vmem:[%s1156 + $0x48] sm:$0xff] %v1175
                  %v1177 = vld [vmem:[%s1155 + $0x50] sm:$0xff]
                  %1178 = vst [vmem:[%s1156 + $0x50] sm:$0xff] %v1177
                  %v1179 = vld [vmem:[%s1155 + $0x58] sm:$0xff]
                  %1180 = vst [vmem:[%s1156 + $0x58] sm:$0xff] %v1179
                  %v1181 = vld [vmem:[%s1155 + $0x60] sm:$0xff]
                  %1182 = vst [vmem:[%s1156 + $0x60] sm:$0xff] %v1181
                  %v1183 = vld [vmem:[%s1155 + $0x68] sm:$0xff]
                  %1184 = vst [vmem:[%s1156 + $0x68] sm:$0xff] %v1183
                  %v1185 = vld [vmem:[%s1155 + $0x70] sm:$0xff]
                  %1186 = vst [vmem:[%s1156 + $0x70] sm:$0xff] %v1185
                  %v1187 = vld [vmem:[%s1155 + $0x78] sm:$0xff]
                  %1188 = vst [vmem:[%s1156 + $0x78] sm:$0xff] %v1187
                  %s1189 = sadd.s32 1, %s1154
                  %p1190 = scmp.ge.s32.totalorder %s1189, %s1147
                  %s1191 = scalar_select %p1190, 0, %s1189
                  %s1192 = smul.u32 %s1191, 128
                  %s1193 = smul.u32 %s1191, 128
                  %s1194 = scalar_lea.vmem %s1051, %s1192 [#allocation5]
                  %s1195 = scalar_lea.vmem %s1062, %s1193
                $region83: #{tpu_custom_call.1} parent=77 // loop_footer
                  %s1151 = sadd.s32 %s1149, 1
                $region84: #{tpu_custom_call.1} parent=77 // loop_footer_branch
                  %1148 = sbr.rel target = $region80
                $region85: #{tpu_custom_call.1} parent=77 // loop_exit
                  _
                %s1196 = sshrl.u32 %s1058, 4
                %s1197 = sand.u32 %s1058, 15
                %s1198 = smul.u32 %s1196, 16
                %s1199 = smul.u32 8, %s1198
                %s1200 = scalar_lea.vmem %s1051, %s1199 [#allocation5]
                %s1201 = smul.u32 8, %s1198
                %s1202 = scalar_lea.vmem %s1062, %s1201
                // While loop
                $region86: #{tpu_custom_call.1} parent=77 // loop_pre_header
                  _
                $region87: #{tpu_custom_call.1} parent=77 // loop_header
                  %s1204 = sphi 0, %s1206
                  %p1205 = scmp.ge.s32.totalorder %s1204, %s1197
                  %s1209 = sphi 0, %s1216
                  %s1210 = sphi %s1200, %s1219
                  %s1211 = sphi %s1202, %s1220
                $region88: #{tpu_custom_call.1} parent=77 // loop_header_branch
                  %1208 = sbr.rel (%p1205) target = $region92
                $region89: #{tpu_custom_call.1} parent=77 // loop_body
                  %v1212 = vld [vmem:[%s1210] sm:$0xff]
                  %1213 = vst [vmem:[%s1211] sm:$0xff] %v1212
                  %s1214 = sadd.s32 1, %s1209
                  %p1215 = scmp.ge.s32.totalorder %s1214, %s1197
                  %s1216 = scalar_select %p1215, 0, %s1214
                  %s1217 = smul.u32 %s1216, 8
                  %s1218 = smul.u32 %s1216, 8
                  %s1219 = scalar_lea.vmem %s1200, %s1217 [#allocation5]
                  %s1220 = scalar_lea.vmem %s1202, %s1218
                $region90: #{tpu_custom_call.1} parent=77 // loop_footer
                  %s1206 = sadd.s32 %s1204, 1
                $region91: #{tpu_custom_call.1} parent=77 // loop_footer_branch
                  %1203 = sbr.rel target = $region87
                $region92: #{tpu_custom_call.1} parent=77 // loop_exit
                  _
              $region78: #{tpu_custom_call.1} parent=55 // pred_fallthru
                _
              // Predicated region
              $region93: #{tpu_custom_call.1} parent=55 // pred_check
                _
              $region94: #{tpu_custom_call.1} parent=55 // pred_check_branch
                %1222 = sbr.rel target = $region96
              $region95: #{tpu_custom_call.1} parent=55 // pred_region
                _
              $region96: #{tpu_custom_call.1} parent=55 // pred_fallthru
                _
            $region56: #{tpu_custom_call.1} parent=51 // pred_fallthru
              _
            // Predicated region
            $region57: #{tpu_custom_call.1} parent=51 // pred_check
              _
            $region58: #{tpu_custom_call.1} parent=51 // pred_check_branch
              %1069 = sbr.rel target = $region60
            $region59: #{tpu_custom_call.1} parent=51 // pred_region
              %s1071 = sshrl.u32 %s1058, 4
              // While loop
              $region61: #{tpu_custom_call.1} parent=59 // loop_pre_header
                _
              $region62: #{tpu_custom_call.1} parent=59 // loop_header
                %s1073 = sphi 0, %s1075
                %p1074 = scmp.ge.s32.totalorder %s1073, %s1071
                %s1078 = sphi 0, %s1115
                %s1079 = sphi %s1051, %s1118
                %s1080 = sphi %s1062, %s1119
              $region63: #{tpu_custom_call.1} parent=59 // loop_header_branch
                %1077 = sbr.rel (%p1074) target = $region67
              $region64: #{tpu_custom_call.1} parent=59 // loop_body
                %v1081 = vld [vmem:[%s1079] sm:$0xff]
                %1082 = vst [vmem:[%s1080] sm:$0xff] %v1081
                %v1083 = vld [vmem:[%s1079 + $0x8] sm:$0xff]
                %1084 = vst [vmem:[%s1080 + $0x8] sm:$0xff] %v1083
                %v1085 = vld [vmem:[%s1079 + $0x10] sm:$0xff]
                %1086 = vst [vmem:[%s1080 + $0x10] sm:$0xff] %v1085
                %v1087 = vld [vmem:[%s1079 + $0x18] sm:$0xff]
                %1088 = vst [vmem:[%s1080 + $0x18] sm:$0xff] %v1087
                %v1089 = vld [vmem:[%s1079 + $0x20] sm:$0xff]
                %1090 = vst [vmem:[%s1080 + $0x20] sm:$0xff] %v1089
                %v1091 = vld [vmem:[%s1079 + $0x28] sm:$0xff]
                %1092 = vst [vmem:[%s1080 + $0x28] sm:$0xff] %v1091
                %v1093 = vld [vmem:[%s1079 + $0x30] sm:$0xff]
                %1094 = vst [vmem:[%s1080 + $0x30] sm:$0xff] %v1093
                %v1095 = vld [vmem:[%s1079 + $0x38] sm:$0xff]
                %1096 = vst [vmem:[%s1080 + $0x38] sm:$0xff] %v1095
                %v1097 = vld [vmem:[%s1079 + $0x40] sm:$0xff]
                %1098 = vst [vmem:[%s1080 + $0x40] sm:$0xff] %v1097
                %v1099 = vld [vmem:[%s1079 + $0x48] sm:$0xff]
                %1100 = vst [vmem:[%s1080 + $0x48] sm:$0xff] %v1099
                %v1101 = vld [vmem:[%s1079 + $0x50] sm:$0xff]
                %1102 = vst [vmem:[%s1080 + $0x50] sm:$0xff] %v1101
                %v1103 = vld [vmem:[%s1079 + $0x58] sm:$0xff]
                %1104 = vst [vmem:[%s1080 + $0x58] sm:$0xff] %v1103
                %v1105 = vld [vmem:[%s1079 + $0x60] sm:$0xff]
                %1106 = vst [vmem:[%s1080 + $0x60] sm:$0xff] %v1105
                %v1107 = vld [vmem:[%s1079 + $0x68] sm:$0xff]
                %1108 = vst [vmem:[%s1080 + $0x68] sm:$0xff] %v1107
                %v1109 = vld [vmem:[%s1079 + $0x70] sm:$0xff]
                %1110 = vst [vmem:[%s1080 + $0x70] sm:$0xff] %v1109
                %v1111 = vld [vmem:[%s1079 + $0x78] sm:$0xff]
                %1112 = vst [vmem:[%s1080 + $0x78] sm:$0xff] %v1111
                %s1113 = sadd.s32 1, %s1078
                %p1114 = scmp.ge.s32.totalorder %s1113, %s1071
                %s1115 = scalar_select %p1114, 0, %s1113
                %s1116 = smul.u32 %s1115, 128
                %s1117 = smul.u32 %s1115, 128
                %s1118 = scalar_lea.vmem %s1051, %s1116 [#allocation5]
                %s1119 = scalar_lea.vmem %s1062, %s1117
              $region65: #{tpu_custom_call.1} parent=59 // loop_footer
                %s1075 = sadd.s32 %s1073, 1
              $region66: #{tpu_custom_call.1} parent=59 // loop_footer_branch
                %1072 = sbr.rel target = $region62
              $region67: #{tpu_custom_call.1} parent=59 // loop_exit
                _
              %s1120 = sshrl.u32 %s1058, 4
              %s1121 = sand.u32 %s1058, 15
              %s1122 = smul.u32 %s1120, 16
              %s1123 = smul.u32 8, %s1122
              %s1124 = scalar_lea.vmem %s1051, %s1123 [#allocation5]
              %s1125 = smul.u32 8, %s1122
              %s1126 = scalar_lea.vmem %s1062, %s1125
              // While loop
              $region68: #{tpu_custom_call.1} parent=59 // loop_pre_header
                _
              $region69: #{tpu_custom_call.1} parent=59 // loop_header
                %s1128 = sphi 0, %s1130
                %p1129 = scmp.ge.s32.totalorder %s1128, %s1121
                %s1133 = sphi 0, %s1140
                %s1134 = sphi %s1124, %s1143
                %s1135 = sphi %s1126, %s1144
              $region70: #{tpu_custom_call.1} parent=59 // loop_header_branch
                %1132 = sbr.rel (%p1129) target = $region74
              $region71: #{tpu_custom_call.1} parent=59 // loop_body
                %v1136 = vld [vmem:[%s1134] sm:$0xff]
                %1137 = vst [vmem:[%s1135] sm:$0xff] %v1136
                %s1138 = sadd.s32 1, %s1133
                %p1139 = scmp.ge.s32.totalorder %s1138, %s1121
                %s1140 = scalar_select %p1139, 0, %s1138
                %s1141 = smul.u32 %s1140, 8
                %s1142 = smul.u32 %s1140, 8
                %s1143 = scalar_lea.vmem %s1124, %s1141 [#allocation5]
                %s1144 = scalar_lea.vmem %s1126, %s1142
              $region72: #{tpu_custom_call.1} parent=59 // loop_footer
                %s1130 = sadd.s32 %s1128, 1
              $region73: #{tpu_custom_call.1} parent=59 // loop_footer_branch
                %1127 = sbr.rel target = $region69
              $region74: #{tpu_custom_call.1} parent=59 // loop_exit
                _
            $region60: #{tpu_custom_call.1} parent=51 // pred_fallthru
              _
          $region52: #{tpu_custom_call.1} parent=47 // pred_fallthru
            _
          %1223 = vnop
        $region48: #{tpu_custom_call.1} parent=39 // pred_fallthru
          _
      $region40: #{tpu_custom_call.1} parent=5 // pred_fallthru
        _
      %p1224 = scmp.le.s32.totalorder 2, %s15
      // Predicated region
      $region97: #{tpu_custom_call.1} parent=5 // pred_check
        %p1225 = pneg %p1224
      $region98: #{tpu_custom_call.1} parent=5 // pred_check_branch
        %1227 = sbr.rel (%p1225) target = $region100
      $region99: #{tpu_custom_call.1} parent=5 // pred_region
        %s1228 = ssub.s32 %s15, 2
        // Predicated region
        $region101: #{tpu_custom_call.1} parent=99 // pred_check
          %p1229 = pneg %p154
        $region102: #{tpu_custom_call.1} parent=99 // pred_check_branch
          %1231 = sbr.rel (%p1229) target = $region104
        $region103: #{tpu_custom_call.1} parent=99 // pred_region
          %s1232 = sand.u32 %s139, 1
          %s1233 = sand.u32 %s139, 1
          %s1234 = smul.addr %s1233, 128
          %s1235 = scalar_lea.vmem [#allocation5], %s1234
        $region104: #{tpu_custom_call.1} parent=99 // pred_fallthru
          _
      $region100: #{tpu_custom_call.1} parent=5 // pred_fallthru
        _
    $region6: #{tpu_custom_call.1} parent=1 // loop_footer
      %s19 = sadd.s32 1, %s15
    $region7: #{tpu_custom_call.1} parent=1 // loop_footer_branch
      %14 = sbr.rel target = $region3
    $region8: #{tpu_custom_call.1} parent=1 // loop_exit
      _
    %1236 = vsyncpa [#allocation4], 1
    %s1237 = scalar_lea.sflag [#allocation4], 1
    %1238 = vsyncpa %s1237, 1

</llo_original>
